<compile_context>
chip_gen: v6e
topology: v6e:2x2x1
jax: 0.10.0
libtpu: 0.0.40
codegen_flags: <defaults>
</compile_context>

<pallas_src>
import math
import functools

import jax
import jax.numpy as jnp
from jax import lax
from jax.experimental import pallas as pl
from jax.experimental.pallas import tpu as pltpu


def _pick_query_tile(S):
    """Largest query tile (<=512, multiple of 8) dividing S; whole S when small."""
    if S <= 512:
        return S
    for cand in (512, 256, 128, 64, 32, 16, 8):
        if S % cand == 0:
            return cand
    return S  # ragged S: fall back to a single tile (module's seqlen is small anyway)


def _attention_kernel(x_ref, wqkv_ref, z_ref, attn_ref, *,
                      scale, dout, tq, n_q_tiles, matmul_dtype):
    # x_ref:    (S, Din)     full sequence for this batch element (resident across q tiles)
    # wqkv_ref: (Din, Dpad)  fused [Wq | Wk | Wv | zero-pad] projection weights (resident)
    # z_ref:    (TQ, Dout)   output block for this query tile
    # attn_ref: (TQ, S)      attention probabilities for this query tile
    x = x_ref[...]
    w = wqkv_ref[...]

    if n_q_tiles == 1:
        # Single fused projection matmul: Q, K, V in one MXU pass.
        proj = jnp.dot(x, w, preferred_element_type=jnp.float32)            # (S, Dpad)
        q = proj[:, 0:dout]                                                  # (TQ==S, Dout)
        k = proj[:, dout:2 * dout]                                           # (S, Dout)
        v = proj[:, 2 * dout:3 * dout]                                       # (S, Dout)
    else:
        # Tiled queries: K/V for the whole sequence (fused 2*Dout-wide), Q for this tile only.
        kv = jnp.dot(x, w[:, dout:], preferred_element_type=jnp.float32)     # (S, Dpad-Dout)
        k = kv[:, 0:dout]
        v = kv[:, dout:2 * dout]
        q_start = pl.multiple_of(pl.program_id(1) * tq, tq)
        x_q = x_ref[pl.ds(q_start, tq), :]
        q = jnp.dot(x_q, w[:, 0:dout], preferred_element_type=jnp.float32)   # (TQ, Dout)

    # scores = (q @ k^T) * scale, contracting dim 1 of both operands directly
    # (avoids materializing k.T via an XLU transpose).
    scores = lax.dot_general(
        q.astype(matmul_dtype), k.astype(matmul_dtype),
        dimension_numbers=(((1,), (1,)), ((), ())),
        preferred_element_type=jnp.float32) * scale                          # (TQ, S)

    # Numerically-stable softmax over the key axis (matches legacy 2-D F.softmax -> dim=1).
    scores = scores - jnp.max(scores, axis=-1, keepdims=True)
    e = jnp.exp(scores)
    denom = jnp.sum(e, axis=-1, keepdims=True)
    r = pl.reciprocal(denom, approx=True)   # EUP vrcp (otherwise-idle slot)
    r = r * (2.0 - denom * r)               # one Newton step -> f32-level accuracy
    p = e * r                                                                # (TQ, S)

    z = jnp.dot(p.astype(matmul_dtype), v.astype(matmul_dtype),
                preferred_element_type=jnp.float32)                          # (TQ, Dout)

    z_ref[...] = z.astype(z_ref.dtype)
    attn_ref[...] = p.astype(attn_ref.dtype)


def attention_layer(x, w_q, w_k, w_v, *, matmul_dtype=None):
    """AttentionLayer.forward (relation_aware=False).

    x:   (B, S, Din) ; w_*: (Din, Dout)  (transpose of nn.Linear.weight, no bias)
    Returns (z, attn): z (B, S, Dout), attn (B, S, S).
    matmul_dtype: optional lower-precision MXU input dtype (e.g. jnp.bfloat16);
                  softmax math / accumulation stay f32. Default: x.dtype.
    """
    B, S, Din = x.shape
    Dout = w_q.shape[1]
    out_dtype = x.dtype
    if matmul_dtype is None:
        matmul_dtype = x.dtype
    scale = 1.0 / math.sqrt(Dout)

    # Fuse the three projections into one weight; pad the fused dim up to a
    # multiple of 128 so the projection output tile is lane-dense.
    w_qkv = jnp.concatenate([w_q, w_k, w_v], axis=1)            # (Din, 3*Dout)
    dpad = ((3 * Dout + 127) // 128) * 128
    if dpad != 3 * Dout:
        w_qkv = jnp.pad(w_qkv, ((0, 0), (0, dpad - 3 * Dout)))
    w_qkv = w_qkv.astype(matmul_dtype)
    x_in = x.astype(matmul_dtype)

    tq = _pick_query_tile(S)
    n_q_tiles = S // tq

    kernel = functools.partial(
        _attention_kernel, scale=scale, dout=Dout, tq=tq,
        n_q_tiles=n_q_tiles, matmul_dtype=matmul_dtype)

    z, attn = pl.pallas_call(
        kernel,
        out_shape=(
            jax.ShapeDtypeStruct((B, S, Dout), out_dtype),
            jax.ShapeDtypeStruct((B, S, S), out_dtype),
        ),
        grid_spec=pltpu.PrefetchScalarGridSpec(
            num_scalar_prefetch=0,
            grid=(B, n_q_tiles),
            in_specs=[
                # Full sequence per batch element; constant along the q-tile axis ->
                # stays resident in VMEM (no re-DMA per query tile).
                pl.BlockSpec((None, S, Din), lambda b, qi: (b, 0, 0)),
                # Fused weights: constant index_map on all axes -> single DMA, resident.
                pl.BlockSpec((Din, dpad), lambda b, qi: (0, 0)),
            ],
            out_specs=[
                pl.BlockSpec((None, tq, Dout), lambda b, qi: (b, qi, 0)),
                pl.BlockSpec((None, tq, S), lambda b, qi: (b, qi, 0)),
            ],
        ),
        compiler_params=pltpu.CompilerParams(
            # Independent axes -> shard across the 2 TensorCores on v7x.
            dimension_semantics=("parallel", "parallel"),
            vmem_limit_bytes=48 * 1024 * 1024,
        ),
    )(x_in, w_qkv)
    return z, attn


def _reference(x, w_q, w_k, w_v):
    q = x @ w_q
    k = x @ w_k
    v = x @ w_v
    scores = jnp.einsum("bqd,bkd->bqk", q, k) / math.sqrt(w_q.shape[1])
    p = jax.nn.softmax(scores, axis=-1)
    z = jnp.einsum("bqk,bkd->bqd", p, v)
    return z, p


if __name__ == "__main__":
    # Small shapes consistent with the module's forward: (batch, seq_len, input_dim)
    B, S, Din, Dout = 2, 8, 16, 32

    key = jax.random.PRNGKey(0)
    kx, kq, kk, kv = jax.random.split(key, 4)

    x = jax.random.normal(kx, (B, S, Din), dtype=jnp.float32)

    # Deterministic parameter init, nn.Linear-style uniform(-1/sqrt(in), 1/sqrt(in)).
    bound = 1.0 / math.sqrt(Din)
    w_q = jax.random.uniform(kq, (Din, Dout), jnp.float32, -bound, bound)
    w_k = jax.random.uniform(kk, (Din, Dout), jnp.float32, -bound, bound)
    w_v = jax.random.uniform(kv, (Din, Dout), jnp.float32, -bound, bound)

    z, attn = attention_layer(x, w_q, w_k, w_v)
    jax.block_until_ready((z, attn))

    z_ref, attn_ref = _reference(x, w_q, w_k, w_v)
    assert jnp.allclose(z, z_ref, atol=1e-4, rtol=1e-4), "z mismatch"
    assert jnp.allclose(attn, attn_ref, atol=1e-4, rtol=1e-4), "attn mismatch"

    print("KERNEL_OK")
</pallas_src>

<mosaic_0001>
module attributes {stable_mosaic.version = 11 : i64} {
  func.func @_attention_kernel(%arg0: i32, %arg1: i32, %arg2: memref<1x8x16xf32, #tpu.memory_space<vmem>>, %arg3: memref<16x128xf32, #tpu.memory_space<vmem>>, %arg4: memref<1x8x32xf32, #tpu.memory_space<vmem>>, %arg5: memref<1x8x8xf32, #tpu.memory_space<vmem>>) attributes {dimension_semantics = [#tpu.dimension_semantics<parallel>, #tpu.dimension_semantics<parallel>], iteration_bounds = array<i64: 2, 1>, scalar_prefetch = 0 : i64, scratch_operands = 0 : i64, tpu.core_type = #tpu.core_type<tc>, window_params = [{transform_indices = @transform_0, window_bounds = array<i64: 1, 8, 16>}, {pipeline_mode = #tpu.pipeline_mode<synchronous>, transform_indices = @transform_1, window_bounds = array<i64: 16, 128>}, {transform_indices = @transform_2, window_bounds = array<i64: 1, 8, 32>}, {transform_indices = @transform_3, window_bounds = array<i64: 1, 8, 8>}]} {
    %c0 = arith.constant 0 : index
    %c0_0 = arith.constant 0 : index
    %c0_1 = arith.constant 0 : index
    %0 = vector.load %arg2[%c0, %c0_0, %c0_1] : memref<1x8x16xf32, #tpu.memory_space<vmem>>, vector<1x8x16xf32>
    %1 = vector.shape_cast %0 : vector<1x8x16xf32> to vector<8x16xf32>
    %c0_2 = arith.constant 0 : index
    %c0_3 = arith.constant 0 : index
    %2 = vector.load %arg3[%c0_2, %c0_3] : memref<16x128xf32, #tpu.memory_space<vmem>>, vector<16x128xf32>
    %cst = arith.constant dense<0.000000e+00> : vector<8x128xf32>
    %3 = tpu.matmul %1, %2, %cst {dimension_numbers = #tpu.dot_dimension_numbers<[1], [0], [0], [1], [0, 0, 1, 1], [], []>} : vector<8x16xf32>, vector<16x128xf32>, vector<8x128xf32> -> vector<8x128xf32>
    %4 = vector.extract_strided_slice %3 {offsets = [0, 0], sizes = [8, 32], strides = [1, 1]} : vector<8x128xf32> to vector<8x32xf32>
    %5 = vector.extract_strided_slice %3 {offsets = [0, 32], sizes = [8, 32], strides = [1, 1]} : vector<8x128xf32> to vector<8x32xf32>
    %6 = vector.extract_strided_slice %3 {offsets = [0, 64], sizes = [8, 32], strides = [1, 1]} : vector<8x128xf32> to vector<8x32xf32>
    %cst_4 = arith.constant dense<0.000000e+00> : vector<8x8xf32>
    %7 = tpu.matmul %4, %5, %cst_4 {dimension_numbers = #tpu.dot_dimension_numbers<[1], [1], [0], [0], [0, 0, 1, 0], [], []>} : vector<8x32xf32>, vector<8x32xf32>, vector<8x8xf32> -> vector<8x8xf32>
    %cst_5 = arith.constant 0.176776692 : f32
    %8 = vector.broadcast %cst_5 : f32 to vector<8x8xf32>
    %9 = arith.mulf %7, %8 : vector<8x8xf32>
    %cst_6 = arith.constant dense<0xFF800000> : vector<8xf32>
    %10 = vector.multi_reduction <maximumf>, %9, %cst_6 [1] : vector<8x8xf32> to vector<8xf32>
    %11 = vector.shape_cast %10 : vector<8xf32> to vector<8x1xf32>
    %12 = vector.broadcast %11 : vector<8x1xf32> to vector<8x8xf32>
    %13 = arith.subf %9, %12 : vector<8x8xf32>
    %14 = math.exp %13 : vector<8x8xf32>
    %cst_7 = arith.constant dense<0.000000e+00> : vector<8xf32>
    %15 = vector.multi_reduction <add>, %14, %cst_7 [1] : vector<8x8xf32> to vector<8xf32>
    %16 = vector.shape_cast %15 : vector<8xf32> to vector<8x1xf32>
    %17 = tpu.reciprocal %16 {approx = true} : vector<8x1xf32> -> vector<8x1xf32>
    %18 = arith.mulf %16, %17 : vector<8x1xf32>
    %cst_8 = arith.constant 2.000000e+00 : f32
    %19 = vector.broadcast %cst_8 : f32 to vector<8x1xf32>
    %20 = arith.subf %19, %18 : vector<8x1xf32>
    %21 = arith.mulf %17, %20 : vector<8x1xf32>
    %22 = vector.broadcast %21 : vector<8x1xf32> to vector<8x8xf32>
    %23 = arith.mulf %14, %22 : vector<8x8xf32>
    %cst_9 = arith.constant dense<0.000000e+00> : vector<8x32xf32>
    %24 = tpu.matmul %23, %6, %cst_9 {dimension_numbers = #tpu.dot_dimension_numbers<[1], [0], [0], [1], [0, 0, 1, 1], [], []>} : vector<8x8xf32>, vector<8x32xf32>, vector<8x32xf32> -> vector<8x32xf32>
    %c0_10 = arith.constant 0 : index
    %c0_11 = arith.constant 0 : index
    %c0_12 = arith.constant 0 : index
    %25 = vector.load %arg4[%c0_10, %c0_11, %c0_12] : memref<1x8x32xf32, #tpu.memory_space<vmem>>, vector<1x8x32xf32>
    %26 = vector.shape_cast %25 : vector<1x8x32xf32> to vector<8x32xf32>
    %27 = vector.shape_cast %24 : vector<8x32xf32> to vector<1x8x32xf32>
    tpu.vector_store %arg4[%c0_10, %c0_11, %c0_12], %27 {strides = array<i32>} : memref<1x8x32xf32, #tpu.memory_space<vmem>>, vector<1x8x32xf32>,
    %c0_13 = arith.constant 0 : index
    %c0_14 = arith.constant 0 : index
    %c0_15 = arith.constant 0 : index
    %28 = vector.load %arg5[%c0_13, %c0_14, %c0_15] : memref<1x8x8xf32, #tpu.memory_space<vmem>>, vector<1x8x8xf32>
    %29 = vector.shape_cast %28 : vector<1x8x8xf32> to vector<8x8xf32>
    %30 = vector.shape_cast %23 : vector<8x8xf32> to vector<1x8x8xf32>
    tpu.vector_store %arg5[%c0_13, %c0_14, %c0_15], %30 {strides = array<i32>} : memref<1x8x8xf32, #tpu.memory_space<vmem>>, vector<1x8x8xf32>,
    return
  }
  func.func @transform_0(%arg0: i32, %arg1: i32) -> (i32, i32, i32) {
    %c0_i32 = arith.constant 0 : i32
    %c0_i32_0 = arith.constant 0 : i32
    %c0_i32_1 = arith.constant 0 : i32
    return %arg0, %c0_i32, %c0_i32_0 : i32, i32, i32
  }
  func.func @transform_1(%arg0: i32, %arg1: i32) -> (i32, i32) {
    %c0_i32 = arith.constant 0 : i32
    %c0_i32_0 = arith.constant 0 : i32
    %c0_i32_1 = arith.constant 0 : i32
    return %c0_i32, %c0_i32_0 : i32, i32
  }
  func.func @transform_2(%arg0: i32, %arg1: i32) -> (i32, i32, i32) {
    %c0_i32 = arith.constant 0 : i32
    %c0_i32_0 = arith.constant 0 : i32
    return %arg0, %arg1, %c0_i32 : i32, i32, i32
  }
  func.func @transform_3(%arg0: i32, %arg1: i32) -> (i32, i32, i32) {
    %c0_i32 = arith.constant 0 : i32
    %c0_i32_0 = arith.constant 0 : i32
    return %arg0, %arg1, %c0_i32 : i32, i32, i32
  }
}

</mosaic_0001>

<llo_original>
// kernel: tpu_custom_call.1
$region0: #{tpu_custom_call.1}
  #allocation0 [shape = 'u32[]', space=smem, size = 0x4, offset = 0x4, fixed_abs, tag = 'smem constant byte address 0x4 - core index']
  #allocation1 [shape = 'u32[144,128]{1,0:T(1,128)}', space=vmem, size = 0x12000, scoped, tag = 'internal scratch']
  %s0 = inlined_call_operand.hbm [shape: f32[2,8,16], index: 0, kind: input, shape index: {}]
  %s1 = inlined_call_operand.hbm [shape: f32[16,128], index: 1, kind: input, shape index: {}]
  %s2 = inlined_call_operand.hbm [shape: f32[2,8,32], index: 2, kind: output, shape index: {0}]
  %s3 = inlined_call_operand.hbm [shape: f32[2,8,8], index: 3, kind: output, shape index: {1}]
  %4 = xla_tuple %s2, %s3
  %s5 = sld [smem:[#allocation0]]
  $region57: #{tpu_custom_call.1} parent=0
    _
  %s7 = ssub.s32 1, %s5
  %s8 = scalar_select 0, %s7, %s5
  $region1: #{tpu_custom_call.1} parent=0
    #allocation2 [shape = 'u8[8192]{0}', space=vmem, size = 0x2000, scoped, tag = 'input window, operand 0']
    #allocation3 [shape = 's32[2]{0}', space=sflag, size = 0x8, scoped, tag = 'scoped memory for tpu_custom_call.1']
    #allocation4 [shape = 's32[2]{0}', space=sflag, size = 0x8, scoped, tag = 'scoped memory for tpu_custom_call.1']
    #allocation5 [shape = 'u8[8192]{0}', space=vmem, size = 0x2000, scoped, tag = 'input window, operand 1, single buffered']
    #allocation6 [shape = 's32[1]{0}', space=sflag, size = 0x4, scoped, tag = 'scoped memory for tpu_custom_call.1']
    #allocation7 [shape = 'u8[8192]{0}', space=vmem, size = 0x2000, scoped, tag = 'output window, operand 0']
    #allocation8 [shape = 'u8[8192]{0}', space=vmem, size = 0x2000, scoped, tag = 'output window, operand 1']
    #allocation9 [shape = 's32[2]{0}', space=sflag, size = 0x8, scoped, tag = 'scoped memory for tpu_custom_call.1']
    %9 = vsyncpa [#allocation3], 0
    %s10 = scalar_lea.sflag [#allocation3], 1
    %11 = vsyncpa %s10, 0
    %12 = vsyncpa [#allocation6], 0
    %13 = vsyncpa [#allocation4], 0
    %s14 = scalar_lea.sflag [#allocation4], 1
    %15 = vsyncpa %s14, 0
    %16 = vsyncpa [#allocation9], 0
    %s17 = scalar_lea.sflag [#allocation9], 1
    %18 = vsyncpa %s17, 0
    loop: start=0, step=1, limit=4
    $region2: #{tpu_custom_call.1} parent=1 // loop_pre_header
      _
    $region3: #{tpu_custom_call.1} parent=1 // loop_header
      %s20 = sphi 0, %s24
      %p21 = scmp.ge.s32.totalorder %s20, 4
      %s27 = sphi 0, %s39
      %s28 = sphi 0, %s35
      %s29 = sphi 0, %s27
      %s30 = sphi 0, %s28
      %s31 = sphi 0, %s29
      %s32 = sphi 0, %s30
      %s42 = sphi 0, %s44
      %s45 = sphi 0, %s42
      %s46 = sphi 0, %s45
      %s62 = sphi 0, %s46
      %s66 = sphi 0, %s66
      %s68 = sphi 0, %s66
      %s69 = sphi 0, %s68
      %s83 = sphi 0, %s69
      %s91 = sphi 0, %s93
      %s94 = sphi 0, %s91
      %s95 = sphi 0, %s94
      %s111 = sphi 0, %s95
      %s119 = sphi 0, %s121
      %s122 = sphi 0, %s119
      %s123 = sphi 0, %s122
      %s139 = sphi 0, %s123
    $region4: #{tpu_custom_call.1} parent=1 // loop_header_branch
      %23 = sbr.rel (%p21) target = $region8
    $region5: #{tpu_custom_call.1} parent=1 // loop_body
      %s25 = ssub.s32 %s20, 1
      %s26 = ssub.s32 %s20, 2
      %s33 = sadd.s32 1, %s28
      %p34 = scmp.ge.s32.totalorder %s33, 1
      %s35 = scalar_select %p34, 0, %s33
      %s36 = sadd.s32 1, %s27
      %s37 = scalar_select %p34, %s36, %s27
      %p38 = scmp.ge.s32.totalorder %s37, 2
      %s39 = scalar_select %p38, 0, %s37
      %s40 = ssub.s32 %s27, %s39
      %p41 = scmp.eq.s32.totalorder %s40, 0
      %s43 = sadd.s32 %s42, 1
      %s44 = scalar_select %p41, %s42, %s43
      %p47 = pneg %p41
      %p48 = scmp.eq.s32.totalorder %s20, 1
      %p49 = por %p47, %p48
      %p50 = scmp.ne.s32.totalorder %s42, %s45
      %p51 = scmp.eq.s32.totalorder %s20, 0
      %p52 = por %p50, %p51
      %p53 = scmp.ne.s32.totalorder %s42, %s45
      %p54 = scmp.eq.s32.totalorder %s25, 1
      %p55 = por %p53, %p54
      %p56 = scmp.ne.s32.totalorder %s45, %s46
      %p57 = scmp.eq.s32.totalorder %s25, 0
      %p58 = por %p56, %p57
      %p59 = scmp.ne.s32.totalorder %s45, %s46
      %p60 = scmp.eq.s32.totalorder %s26, 1
      %p61 = por %p59, %p60
      %p63 = scmp.ne.s32.totalorder %s46, %s62
      %p64 = scmp.eq.s32.totalorder %s26, 0
      %p65 = por %p63, %p64
      %s67 = sadd.s32 %s66, 1
      %p70 = scmp.eq.s32.totalorder %s20, 1
      %p71 = scmp.ne.s32.totalorder %s66, %s68
      %p72 = scmp.eq.s32.totalorder %s20, 0
      %p73 = por %p71, %p72
      %p74 = scmp.ne.s32.totalorder %s66, %s68
      %p75 = scmp.eq.s32.totalorder %s25, 1
      %p76 = por %p74, %p75
      %p77 = scmp.ne.s32.totalorder %s68, %s69
      %p78 = scmp.eq.s32.totalorder %s25, 0
      %p79 = por %p77, %p78
      %p80 = scmp.ne.s32.totalorder %s68, %s69
      %p81 = scmp.eq.s32.totalorder %s26, 1
      %p82 = por %p80, %p81
      %p84 = scmp.ne.s32.totalorder %s69, %s83
      %p85 = scmp.eq.s32.totalorder %s26, 0
      %p86 = por %p84, %p85
      %s87 = ssub.s32 %s27, %s39
      %s88 = ssub.s32 %s28, %s35
      %s89 = sor.u32 %s87, %s88
      %p90 = scmp.eq.s32.totalorder %s89, 0
      %s92 = sadd.s32 %s91, 1
      %s93 = scalar_select %p90, %s91, %s92
      %p96 = pneg %p90
      %p97 = scmp.eq.s32.totalorder %s20, 1
      %p98 = por %p96, %p97
      %p99 = scmp.ne.s32.totalorder %s91, %s94
      %p100 = scmp.eq.s32.totalorder %s20, 0
      %p101 = por %p99, %p100
      %p102 = scmp.ne.s32.totalorder %s91, %s94
      %p103 = scmp.eq.s32.totalorder %s25, 1
      %p104 = por %p102, %p103
      %p105 = scmp.ne.s32.totalorder %s94, %s95
      %p106 = scmp.eq.s32.totalorder %s25, 0
      %p107 = por %p105, %p106
      %p108 = scmp.ne.s32.totalorder %s94, %s95
      %p109 = scmp.eq.s32.totalorder %s26, 1
      %p110 = por %p108, %p109
      %p112 = scmp.ne.s32.totalorder %s95, %s111
      %p113 = scmp.eq.s32.totalorder %s26, 0
      %p114 = por %p112, %p113
      %s115 = ssub.s32 %s27, %s39
      %s116 = ssub.s32 %s28, %s35
      %s117 = sor.u32 %s115, %s116
      %p118 = scmp.eq.s32.totalorder %s117, 0
      %s120 = sadd.s32 %s119, 1
      %s121 = scalar_select %p118, %s119, %s120
      %p124 = pneg %p118
      %p125 = scmp.eq.s32.totalorder %s20, 1
      %p126 = por %p124, %p125
      %p127 = scmp.ne.s32.totalorder %s119, %s122
      %p128 = scmp.eq.s32.totalorder %s20, 0
      %p129 = por %p127, %p128
      %p130 = scmp.ne.s32.totalorder %s119, %s122
      %p131 = scmp.eq.s32.totalorder %s25, 1
      %p132 = por %p130, %p131
      %p133 = scmp.ne.s32.totalorder %s122, %s123
      %p134 = scmp.eq.s32.totalorder %s25, 0
      %p135 = por %p133, %p134
      %p136 = scmp.ne.s32.totalorder %s122, %s123
      %p137 = scmp.eq.s32.totalorder %s26, 1
      %p138 = por %p136, %p137
      %p140 = scmp.ne.s32.totalorder %s123, %s139
      %p141 = scmp.eq.s32.totalorder %s26, 0
      %p142 = por %p140, %p141
      %p143 = scmp.le.s32.totalorder 1, %s20
      %p144 = scmp.lt.s32.totalorder %s20, 3
      %p145 = pnand %p143, %p144
      %p146 = pneg %p145
      // Predicated region
      $region9: #{tpu_custom_call.1} parent=5 // pred_check
        _
      $region10: #{tpu_custom_call.1} parent=5 // pred_check_branch
        %148 = sbr.rel (%p145) target = $region12
      $region11: #{tpu_custom_call.1} parent=5 // pred_region
        %s149 = ssub.s32 %s20, 1
        // Predicated region
        $region13: #{tpu_custom_call.1} parent=11 // pred_check
          %p150 = pneg %p79
        $region14: #{tpu_custom_call.1} parent=11 // pred_check_branch
          %152 = sbr.rel (%p150) target = $region16
        $region15: #{tpu_custom_call.1} parent=11 // pred_region
          %s154 = ssub.s32 256, 256
          %155 = vsyncadd [#allocation6], %s154
          %s156 = sshll.u32 [#allocation5], 4
          %s157 = int_to_ptr.vmem [resolvable:$true] %s156
          %162 = dma.hbm_to_vmem [thread:$0]  %s1, 256, %s157, [#allocation6], 128, 128, 8
        $region16: #{tpu_custom_call.1} parent=11 // pred_fallthru
          _
      $region12: #{tpu_custom_call.1} parent=5 // pred_fallthru
        _
      %p163 = scmp.lt.s32.totalorder %s20, 2
      // Predicated region
      $region17: #{tpu_custom_call.1} parent=5 // pred_check
        %p164 = pneg %p163
      $region18: #{tpu_custom_call.1} parent=5 // pred_check_branch
        %166 = sbr.rel (%p164) target = $region20
      $region19: #{tpu_custom_call.1} parent=5 // pred_region
        // Predicated region
        $region21: #{tpu_custom_call.1} parent=19 // pred_check
          %p167 = pneg %p52
        $region22: #{tpu_custom_call.1} parent=19 // pred_check_branch
          %169 = sbr.rel (%p167) target = $region24
        $region23: #{tpu_custom_call.1} parent=19 // pred_region
          %s170 = sand.u32 %s42, 1
          %s171 = scalar_lea.sflag [#allocation3], %s170
          %s172 = sand.u32 %s42, 1
          %s173 = smul.addr %s172, 8
          %s174 = scalar_lea.vmem [#allocation2], %s173
          %s176 = ssub.s32 128, 128
          %177 = vsyncadd %s171, %s176
          %s178 = smul.addr %s27, 128
          %s179 = scalar_lea.hbm %s0, %s178
          %s181 = sshll.u32 %s174, 4
          %s182 = int_to_ptr.vmem [resolvable:$true] %s181
          %184 = dma.hbm_to_vmem [thread:$0]  %s179, 128, %s182, %s171
        $region24: #{tpu_custom_call.1} parent=19 // pred_fallthru
          _
      $region20: #{tpu_custom_call.1} parent=5 // pred_fallthru
        _
      %p185 = scmp.le.s32.totalorder 1, %s20
      %p186 = scmp.lt.s32.totalorder %s20, 3
      %p187 = pnand %p185, %p186
      %p188 = pneg %p187
      // Predicated region
      $region25: #{tpu_custom_call.1} parent=5 // pred_check
        _
      $region26: #{tpu_custom_call.1} parent=5 // pred_check_branch
        %190 = sbr.rel (%p187) target = $region28
      $region27: #{tpu_custom_call.1} parent=5 // pred_region
        %s191 = ssub.s32 %s20, 1
        %s192 = sand.u32 %s45, 1
        %s193 = scalar_lea.sflag [#allocation3], %s192
        %s194 = sand.u32 %s45, 1
        %s195 = smul.addr %s194, 8
        %s196 = scalar_lea.vmem [#allocation2], %s195
        // Predicated region
        $region29: #{tpu_custom_call.1} parent=27 // pred_check
          %p197 = pneg %p58
        $region30: #{tpu_custom_call.1} parent=27 // pred_check_branch
          %199 = sbr.rel (%p197) target = $region32
        $region31: #{tpu_custom_call.1} parent=27 // pred_region
          %200 = dma.done %s193, 128
        $region32: #{tpu_custom_call.1} parent=27 // pred_fallthru
          _
        // Predicated region
        $region33: #{tpu_custom_call.1} parent=27 // pred_check
          %p201 = pneg %p79
        $region34: #{tpu_custom_call.1} parent=27 // pred_check_branch
          %203 = sbr.rel (%p201) target = $region36
        $region35: #{tpu_custom_call.1} parent=27 // pred_region
          %204 = dma.done [#allocation6], 256
        $region36: #{tpu_custom_call.1} parent=27 // pred_fallthru
          _
        %s205 = sand.u32 %s45, 1
        %s206 = scalar_lea.sflag [#allocation3], %s205
        %s207 = sand.u32 %s45, 1
        %s208 = smul.addr %s207, 8
        %s209 = scalar_lea.vmem [#allocation2], %s208
        %p210 = pneg %p58
        %p211 = pneg %p55
        %p212 = pneg %p79
        %p213 = pneg %p76
        %p214 = pneg %p107
        %p215 = pneg %p104
        %s216 = sand.u32 %s94, 1
        %s217 = scalar_lea.sflag [#allocation4], %s216
        %s218 = sand.u32 %s94, 1
        %s219 = smul.addr %s218, 8
        %s220 = scalar_lea.vmem [#allocation7], %s219
        %p221 = pneg %p135
        %p222 = pneg %p132
        %s223 = sand.u32 %s122, 1
        %s224 = scalar_lea.sflag [#allocation9], %s223
        %s225 = sand.u32 %s122, 1
        %s226 = smul.addr %s225, 8
        %s227 = scalar_lea.vmem [#allocation8], %s226
        %v228 = vld [vmem:[%s196] sm:$0xff]
        %v229 = vld [vmem:[#allocation5] sm:$0xff]
        %v230 = vld [vmem:[#allocation5 + $0x8] sm:$0xff]
        %vm231 = vcmask 130048
        %v233 = vsel %vm231, %v228, 0
        %235 = vmatprep.subr.mxu0 0.0
        %236 = vmatpush1.msra.mxu0 0.0
        %237 = vmatprep.subr.mxu0 0.0
        %238 = vmatpush1.msra.mxu0 0.0
        %239 = vmatprep.subr.mxu0 0.0
        %240 = vmatpush1.msra.mxu0 0.0
        %241 = vmatprep.subr.mxu0 0.0
        %242 = vmatpush1.msra.mxu0 0.0
        %243 = vmatprep.subr.mxu0 0.0
        %244 = vmatpush1.msra.mxu0 0.0
        %245 = vmatprep.subr.mxu0 0.0
        %246 = vmatpush1.msra.mxu0 0.0
        %247 = vmatprep.subr.mxu0 0.0
        %248 = vmatpush1.msra.mxu0 0.0
        %249 = vmatprep.subr.mxu0 0.0
        %250 = vmatpush1.msra.mxu0 0.0
        %251 = vmatprep.subr.mxu0 0.0
        %252 = vmatpush1.msra.mxu0 0.0
        %253 = vmatprep.subr.mxu0 0.0
        %254 = vmatpush1.msra.mxu0 0.0
        %255 = vmatprep.subr.mxu0 0.0
        %256 = vmatpush1.msra.mxu0 0.0
        %257 = vmatprep.subr.mxu0 0.0
        %258 = vmatpush1.msra.mxu0 0.0
        %259 = vmatprep.subr.mxu0 0.0
        %260 = vmatpush1.msra.mxu0 0.0
        %261 = vmatprep.subr.mxu0 0.0
        %262 = vmatpush1.msra.mxu0 0.0
        %263 = vmatprep.subr.mxu0 0.0
        %264 = vmatpush1.msra.mxu0 %v230
        %265 = vmatprep.subr.mxu0 0.0
        %266 = vmatpush1.msra.mxu0 %v229
        %267 = vmatprep.subr.mxu0 0.0
        %268 = vmatpush2.msra.mxu0 0.0
        %269 = vmatprep.subr.mxu0 0.0
        %270 = vmatpush2.msra.mxu0 0.0
        %271 = vmatprep.subr.mxu0 0.0
        %272 = vmatpush2.msra.mxu0 0.0
        %273 = vmatprep.subr.mxu0 0.0
        %274 = vmatpush2.msra.mxu0 0.0
        %275 = vmatprep.subr.mxu0 0.0
        %276 = vmatpush2.msra.mxu0 0.0
        %277 = vmatprep.subr.mxu0 0.0
        %278 = vmatpush2.msra.mxu0 0.0
        %279 = vmatprep.subr.mxu0 0.0
        %280 = vmatpush2.msra.mxu0 0.0
        %281 = vmatprep.subr.mxu0 0.0
        %282 = vmatpush2.msra.mxu0 0.0
        %283 = vmatprep.subr.mxu0 0.0
        %284 = vmatpush2.msra.mxu0 0.0
        %285 = vmatprep.subr.mxu0 0.0
        %286 = vmatpush2.msra.mxu0 0.0
        %287 = vmatprep.subr.mxu0 0.0
        %288 = vmatpush2.msra.mxu0 0.0
        %289 = vmatprep.subr.mxu0 0.0
        %290 = vmatpush2.msra.mxu0 0.0
        %291 = vmatprep.subr.mxu0 0.0
        %292 = vmatpush2.msra.mxu0 0.0
        %293 = vmatprep.subr.mxu0 0.0
        %294 = vmatpush2.msra.mxu0 0.0
        %295 = vmatprep.subr.mxu0 0.0
        %296 = vmatpush2.msra.mxu0 0.0
        %297 = vmatprep.subr.mxu0 0.0
        %298 = vmatpush2.msra.mxu0 0.0
        %299 = vmatprep.mubr.f32.mxu0 0.0
        %300 = vmatmul.mubr.f32.gmra.mxu0 %v233
        %v301 = vpop.f32.mrf.mxu0
        %v302 = vadd.f32 0.0, %v301
        %v303 = vpop.f32.mrf.mxu0
        %304 = vdwg.mxu0
        %306 = vrot.lane.b32.xlu0 %v302, 96
        %v307 = vpop.permute.xlu0 %306
        %vm308 = vcmask 261120
        %v309 = vsel %vm308, %v302, 0
        %v311 = vsel %vm308, %v307, 0
        %313 = vmatprep.subr.mxu0 0.0
        %314 = vmatpush1.xpose.msra.mxu0 0.0
        %315 = vmatprep.subr.mxu0 0.0
        %316 = vmatpush1.xpose.msra.mxu0 0.0
        %317 = vmatprep.subr.mxu0 0.0
        %318 = vmatpush1.xpose.msra.mxu0 0.0
        %319 = vmatprep.subr.mxu0 0.0
        %320 = vmatpush1.xpose.msra.mxu0 0.0
        %321 = vmatprep.subr.mxu0 0.0
        %322 = vmatpush1.xpose.msra.mxu0 0.0
        %323 = vmatprep.subr.mxu0 0.0
        %324 = vmatpush1.xpose.msra.mxu0 0.0
        %325 = vmatprep.subr.mxu0 0.0
        %326 = vmatpush1.xpose.msra.mxu0 0.0
        %327 = vmatprep.subr.mxu0 0.0
        %328 = vmatpush1.xpose.msra.mxu0 0.0
        %329 = vmatprep.subr.mxu0 0.0
        %330 = vmatpush1.xpose.msra.mxu0 0.0
        %331 = vmatprep.subr.mxu0 0.0
        %332 = vmatpush1.xpose.msra.mxu0 0.0
        %333 = vmatprep.subr.mxu0 0.0
        %334 = vmatpush1.xpose.msra.mxu0 0.0
        %335 = vmatprep.subr.mxu0 0.0
        %336 = vmatpush1.xpose.msra.mxu0 0.0
        %337 = vmatprep.subr.mxu0 0.0
        %338 = vmatpush1.xpose.msra.mxu0 0.0
        %339 = vmatprep.subr.mxu0 0.0
        %340 = vmatpush1.xpose.msra.mxu0 0.0
        %341 = vmatprep.subr.mxu0 0.0
        %342 = vmatpush1.xpose.msra.mxu0 0.0
        %343 = vmatprep.subr.mxu0 0.0
        %344 = vmatpush1.xpose.msra.mxu0 %v311
        %345 = vmatprep.subr.mxu0 0.0
        %346 = vmatpush2.xpose.msra.mxu0 0.0
        %347 = vmatprep.subr.mxu0 0.0
        %348 = vmatpush2.xpose.msra.mxu0 0.0
        %349 = vmatprep.subr.mxu0 0.0
        %350 = vmatpush2.xpose.msra.mxu0 0.0
        %351 = vmatprep.subr.mxu0 0.0
        %352 = vmatpush2.xpose.msra.mxu0 0.0
        %353 = vmatprep.subr.mxu0 0.0
        %354 = vmatpush2.xpose.msra.mxu0 0.0
        %355 = vmatprep.subr.mxu0 0.0
        %356 = vmatpush2.xpose.msra.mxu0 0.0
        %357 = vmatprep.subr.mxu0 0.0
        %358 = vmatpush2.xpose.msra.mxu0 0.0
        %359 = vmatprep.subr.mxu0 0.0
        %360 = vmatpush2.xpose.msra.mxu0 0.0
        %361 = vmatprep.subr.mxu0 0.0
        %362 = vmatpush2.xpose.msra.mxu0 0.0
        %363 = vmatprep.subr.mxu0 0.0
        %364 = vmatpush2.xpose.msra.mxu0 0.0
        %365 = vmatprep.subr.mxu0 0.0
        %366 = vmatpush2.xpose.msra.mxu0 0.0
        %367 = vmatprep.subr.mxu0 0.0
        %368 = vmatpush2.xpose.msra.mxu0 0.0
        %369 = vmatprep.subr.mxu0 0.0
        %370 = vmatpush2.xpose.msra.mxu0 0.0
        %371 = vmatprep.subr.mxu0 0.0
        %372 = vmatpush2.xpose.msra.mxu0 0.0
        %373 = vmatprep.subr.mxu0 0.0
        %374 = vmatpush2.xpose.msra.mxu0 0.0
        %375 = vmatprep.subr.mxu0 0.0
        %376 = vmatpush2.xpose.msra.mxu0 0.0
        %377 = vmatprep.mubr.f32.mxu0 0.0
        %378 = vmatmul.mubr.f32.gmra.mxu0 %v309
        %v379 = vpop.f32.mrf.mxu0
        %v380 = vadd.f32 0.0, %v379
        %v381 = vpop.f32.mrf.mxu0
        %382 = vdwg.mxu0
        %v383 = vmul.f32 %v380, 0.17677669
        %vm384 = vcmask 64512
        %v385 = vsel %vm384, %v383, -inf
        %386 = vmax.xlane.f32.xlu0 %v385
        %v387 = vpop.xlane.xlu0 %386
        %v388 = vsub.f32 %v383, %v387
        %v389 = vmul.f32 %v388, 1.442695
        %v390 = vpow.pop %v389
        %v391 = vsel %vm384, %v390, 0.0
        %392 = vadd.xlane.f32.xlu0 %v391
        %v393 = vpop.xlane.xlu0 %392
        %v394 = vrcp.pop %v393
        %v395 = vmul.f32 %v393, %v394
        %v396 = vsub.f32 2.0, %v395
        %v397 = vmul.f32 %v394, %v396
        %v398 = vmul.f32 %v390, %v397
        %399 = vrot.lane.b32.xlu0 %v302, 64
        %v400 = vpop.permute.xlu0 %399
        %v403 = vsel %vm384, %v398, 0
        %405 = vmatprep.subr.mxu0 0.0
        %406 = vmatpush1.msra.mxu0 0.0
        %407 = vmatprep.subr.mxu0 0.0
        %408 = vmatpush1.msra.mxu0 0.0
        %409 = vmatprep.subr.mxu0 0.0
        %410 = vmatpush1.msra.mxu0 0.0
        %411 = vmatprep.subr.mxu0 0.0
        %412 = vmatpush1.msra.mxu0 0.0
        %413 = vmatprep.subr.mxu0 0.0
        %414 = vmatpush1.msra.mxu0 0.0
        %415 = vmatprep.subr.mxu0 0.0
        %416 = vmatpush1.msra.mxu0 0.0
        %417 = vmatprep.subr.mxu0 0.0
        %418 = vmatpush1.msra.mxu0 0.0
        %419 = vmatprep.subr.mxu0 0.0
        %420 = vmatpush1.msra.mxu0 0.0
        %421 = vmatprep.subr.mxu0 0.0
        %422 = vmatpush1.msra.mxu0 0.0
        %423 = vmatprep.subr.mxu0 0.0
        %424 = vmatpush1.msra.mxu0 0.0
        %425 = vmatprep.subr.mxu0 0.0
        %426 = vmatpush1.msra.mxu0 0.0
        %427 = vmatprep.subr.mxu0 0.0
        %428 = vmatpush1.msra.mxu0 0.0
        %429 = vmatprep.subr.mxu0 0.0
        %430 = vmatpush1.msra.mxu0 0.0
        %431 = vmatprep.subr.mxu0 0.0
        %432 = vmatpush1.msra.mxu0 0.0
        %433 = vmatprep.subr.mxu0 0.0
        %434 = vmatpush1.msra.mxu0 0.0
        %435 = vmatprep.subr.mxu0 0.0
        %436 = vmatpush1.msra.mxu0 %v400
        %437 = vmatprep.subr.mxu0 0.0
        %438 = vmatpush2.msra.mxu0 0.0
        %439 = vmatprep.subr.mxu0 0.0
        %440 = vmatpush2.msra.mxu0 0.0
        %441 = vmatprep.subr.mxu0 0.0
        %442 = vmatpush2.msra.mxu0 0.0
        %443 = vmatprep.subr.mxu0 0.0
        %444 = vmatpush2.msra.mxu0 0.0
        %445 = vmatprep.subr.mxu0 0.0
        %446 = vmatpush2.msra.mxu0 0.0
        %447 = vmatprep.subr.mxu0 0.0
        %448 = vmatpush2.msra.mxu0 0.0
        %449 = vmatprep.subr.mxu0 0.0
        %450 = vmatpush2.msra.mxu0 0.0
        %451 = vmatprep.subr.mxu0 0.0
        %452 = vmatpush2.msra.mxu0 0.0
        %453 = vmatprep.subr.mxu0 0.0
        %454 = vmatpush2.msra.mxu0 0.0
        %455 = vmatprep.subr.mxu0 0.0
        %456 = vmatpush2.msra.mxu0 0.0
        %457 = vmatprep.subr.mxu0 0.0
        %458 = vmatpush2.msra.mxu0 0.0
        %459 = vmatprep.subr.mxu0 0.0
        %460 = vmatpush2.msra.mxu0 0.0
        %461 = vmatprep.subr.mxu0 0.0
        %462 = vmatpush2.msra.mxu0 0.0
        %463 = vmatprep.subr.mxu0 0.0
        %464 = vmatpush2.msra.mxu0 0.0
        %465 = vmatprep.subr.mxu0 0.0
        %466 = vmatpush2.msra.mxu0 0.0
        %467 = vmatprep.subr.mxu0 0.0
        %468 = vmatpush2.msra.mxu0 0.0
        %469 = vmatprep.mubr.f32.mxu0 0.0
        %470 = vmatmul.mubr.f32.gmra.mxu0 %v403
        %v471 = vpop.f32.mrf.mxu0
        %v472 = vadd.f32 0.0, %v471
        %v473 = vpop.f32.mrf.mxu0
        %474 = vdwg.mxu0
        %475 = vst.msk [vmem:[%s220] sm:$0xff] %vm308, %v472
        %476 = vst.msk [vmem:[%s227] sm:$0xff] %vm384, %v398
        %s477 = sand.u32 %s94, 1
        %s478 = scalar_lea.sflag [#allocation4], %s477
        %s479 = sand.u32 %s94, 1
        %s480 = smul.addr %s479, 8
        %s481 = scalar_lea.vmem [#allocation7], %s480
        %s482 = sand.u32 %s122, 1
        %s483 = scalar_lea.sflag [#allocation9], %s482
        %s484 = sand.u32 %s122, 1
        %s485 = smul.addr %s484, 8
        %s486 = scalar_lea.vmem [#allocation8], %s485
        // Predicated region
        $region37: #{tpu_custom_call.1} parent=27 // pred_check
          %p487 = pneg %p104
        $region38: #{tpu_custom_call.1} parent=27 // pred_check_branch
          %489 = sbr.rel (%p487) target = $region40
        $region39: #{tpu_custom_call.1} parent=27 // pred_region
          %s491 = ssub.s32 128, 128
          %492 = vsyncadd %s478, %s491
          %s493 = sadd.s32 %s30, %s29
          %s494 = smul.addr %s493, 128
          %s495 = scalar_lea.hbm %s2, %s494
          %s497 = sshll.u32 %s481, 4
          %s498 = int_to_ptr.vmem [resolvable:$true] %s497
          %500 = dma.vmem_to_hbm [thread:$0]  %s498, 128, %s495, %s478
        $region40: #{tpu_custom_call.1} parent=27 // pred_fallthru
          _
        // Predicated region
        $region41: #{tpu_custom_call.1} parent=27 // pred_check
          %p501 = pneg %p132
        $region42: #{tpu_custom_call.1} parent=27 // pred_check_branch
          %503 = sbr.rel (%p501) target = $region44
        $region43: #{tpu_custom_call.1} parent=27 // pred_region
          %s505 = ssub.s32 128, 128
          %506 = vsyncadd %s483, %s505
          %s507 = sadd.s32 %s30, %s29
          %s508 = smul.addr %s507, 128
          %s509 = scalar_lea.hbm %s3, %s508
          %s511 = sshll.u32 %s486, 4
          %s512 = int_to_ptr.vmem [resolvable:$true] %s511
          %514 = dma.vmem_to_hbm [thread:$0]  %s512, 128, %s509, %s483
        $region44: #{tpu_custom_call.1} parent=27 // pred_fallthru
          _
      $region28: #{tpu_custom_call.1} parent=5 // pred_fallthru
        _
      %p515 = scmp.le.s32.totalorder 2, %s20
      // Predicated region
      $region45: #{tpu_custom_call.1} parent=5 // pred_check
        %p516 = pneg %p515
      $region46: #{tpu_custom_call.1} parent=5 // pred_check_branch
        %518 = sbr.rel (%p516) target = $region48
      $region47: #{tpu_custom_call.1} parent=5 // pred_region
        %s519 = ssub.s32 %s20, 2
        // Predicated region
        $region49: #{tpu_custom_call.1} parent=47 // pred_check
          %p520 = pneg %p110
        $region50: #{tpu_custom_call.1} parent=47 // pred_check_branch
          %522 = sbr.rel (%p520) target = $region52
        $region51: #{tpu_custom_call.1} parent=47 // pred_region
          %s523 = sand.u32 %s95, 1
          %s524 = scalar_lea.sflag [#allocation4], %s523
          %s525 = sand.u32 %s95, 1
          %s526 = smul.addr %s525, 8
          %s527 = scalar_lea.vmem [#allocation7], %s526
          %528 = dma.done %s524, 128
        $region52: #{tpu_custom_call.1} parent=47 // pred_fallthru
          _
        // Predicated region
        $region53: #{tpu_custom_call.1} parent=47 // pred_check
          %p529 = pneg %p138
        $region54: #{tpu_custom_call.1} parent=47 // pred_check_branch
          %531 = sbr.rel (%p529) target = $region56
        $region55: #{tpu_custom_call.1} parent=47 // pred_region
          %s532 = sand.u32 %s123, 1
          %s533 = scalar_lea.sflag [#allocation9], %s532
          %s534 = sand.u32 %s123, 1
          %s535 = smul.addr %s534, 8
          %s536 = scalar_lea.vmem [#allocation8], %s535
          %537 = dma.done %s533, 128
        $region56: #{tpu_custom_call.1} parent=47 // pred_fallthru
          _
      $region48: #{tpu_custom_call.1} parent=5 // pred_fallthru
        _
    $region6: #{tpu_custom_call.1} parent=1 // loop_footer
      %s24 = sadd.s32 1, %s20
    $region7: #{tpu_custom_call.1} parent=1 // loop_footer_branch
      %19 = sbr.rel target = $region3
    $region8: #{tpu_custom_call.1} parent=1 // loop_exit
      _
    %538 = vsyncpa [#allocation3], 1
    %s539 = scalar_lea.sflag [#allocation3], 1
    %540 = vsyncpa %s539, 1
    %541 = vsyncpa [#allocation6], 1
    %542 = vsyncpa [#allocation4], 1
    %s543 = scalar_lea.sflag [#allocation4], 1
    %544 = vsyncpa %s543, 1
    %545 = vsyncpa [#allocation9], 1
    %s546 = scalar_lea.sflag [#allocation9], 1
    %547 = vsyncpa %s546, 1

</llo_original>
